<compile_context>
chip_gen: v7x
topology: tpu7x:2x2x1
jax: 0.10.0
libtpu: 0.0.40
codegen_flags: <defaults>
</compile_context>

<pallas_src>
import functools
import math

import jax
import jax.numpy as jnp
from jax import lax
from jax.experimental import pallas as pl
from jax.experimental.pallas import tpu as pltpu

EPS = 1e-5
LEAKY_SLOPE = 0.001
LANE = 128
SUBLANE = 8
SUBLANE_BF16 = 16   # bf16 packs 2 rows per sublane -> (16, 128) tile


def _round_up(n, m):
    return ((n + m - 1) // m) * m


def _bn_lrelu(h, gamma, beta, batch, padded_batch):
    """Training-mode BatchNorm1d (stats over *valid* batch rows) + LeakyReLU.

    Two-pass variance (subtract mean, then square) for numerical robustness.
    """
    if padded_batch != batch:
        row_valid = lax.broadcasted_iota(jnp.int32, (padded_batch, 1), 0) < batch
    else:
        row_valid = None
    inv_b = 1.0 / batch

    hv = jnp.where(row_valid, h, 0.0) if row_valid is not None else h
    mean = jnp.sum(hv, axis=0, keepdims=True) * inv_b
    centered = h - mean
    cv = jnp.where(row_valid, centered, 0.0) if row_valid is not None else centered
    var = jnp.sum(cv * cv, axis=0, keepdims=True) * inv_b      # biased variance
    scale = gamma * lax.rsqrt(var + EPS)
    h = centered * scale + beta
    return jnp.where(h >= 0, h, LEAKY_SLOPE * h)


def _classification_head_kernel(
    x_ref,            # (Bp, Cp)    bf16
    w1_ref,           # (Cp, C1p)   bf16
    w2_ref,           # (C1p, C2p)  bf16
    w3_ref,           # (C2p, NCp)  bf16
    p_ref,            # (8, Pmax)   f32  rows: [gamma1; beta1; gamma2; beta2; b3; 0; 0; 0]
    out_ref,          # (Bp, NCp)   f32
    *, batch, num_classes,
):
    bp = x_ref.shape[0]
    c1p = w1_ref.shape[1]
    c2p = w2_ref.shape[1]
    ncp = out_ref.shape[1]

    # layer 1: Linear (bias folded away by BN) + BN + LeakyReLU
    h = jnp.dot(x_ref[...], w1_ref[...], preferred_element_type=jnp.float32)
    h = _bn_lrelu(h, p_ref[0:1, :c1p], p_ref[1:2, :c1p], batch, bp)

    # layer 2: Linear (bias folded away by BN) + BN + LeakyReLU
    h = jnp.dot(h.astype(jnp.bfloat16), w2_ref[...],
                preferred_element_type=jnp.float32)
    h = _bn_lrelu(h, p_ref[2:3, :c2p], p_ref[3:4, :c2p], batch, bp)

    # final Linear (bias kept: no BN after it)
    logits = jnp.dot(h.astype(jnp.bfloat16), w3_ref[...],
                     preferred_element_type=jnp.float32) + p_ref[4:5, :ncp]

    # mask padded class lanes only when padding exists
    if ncp != num_classes:
        col_valid = lax.broadcasted_iota(jnp.int32, (1, ncp), 1) < num_classes
        logits = jnp.where(col_valid, logits, -1e30)

    # numerically stable softmax over classes; exact divide so rows sum to 1
    # to f32 precision (approx reciprocal previously broke the row-sum check).
    m = jnp.max(logits, axis=1, keepdims=True)
    e = jnp.exp(logits - m)
    out_ref[...] = e / jnp.sum(e, axis=1, keepdims=True)


def _vmem_bytes(bp, cp, c1p, c2p, ncp):
    pmax = max(c1p, c2p, ncp)
    by = bp * cp * 2                         # x (bf16)
    by += cp * c1p * 2                       # w1 (bf16)
    by += c1p * c2p * 2                      # w2 (bf16)
    by += c2p * ncp * 2                      # w3 (bf16)
    by += 8 * pmax * 4                       # packed params (f32)
    by += bp * ncp * 4                       # out (f32)
    by += 2 * bp * pmax * 4                  # live f32 intermediates (rough)
    return by


def _vmem_ceiling_bytes():
    """Generation-aware single-block ceiling (~25% headroom under physical VMEM)."""
    cap = None
    try:
        cap = getattr(pltpu.get_tpu_info(), "vmem_capacity_bytes", None)
    except Exception:
        cap = None
    if not cap:
        cap = 64 << 20          # conservative fallback: v7x per-TC VMEM
    return int(cap) * 3 // 4    # v5e/v6e: ~96 MiB, v7x: 48 MiB


def classification_head(x, params):
    B, C = x.shape
    in_channels = params["in_channels"]
    num_classes = params["num_classes"]
    assert C == in_channels

    cp, c1p = params["w1"].shape
    c2p = params["w2"].shape[1]
    ncp = params["w3"].shape[1]
    bp = _round_up(max(B, 1), SUBLANE)

    # feed x as bf16 (cast happens before the first matmul anyway)
    xp = x.astype(jnp.bfloat16)
    if (bp, cp) != (B, C):
        xp = jnp.pad(xp, ((0, bp - B), (0, cp - C)))

    vb = _vmem_bytes(bp, cp, c1p, c2p, ncp)
    ceiling = _vmem_ceiling_bytes()
    assert vb <= ceiling, (
        "problem too large for single-block kernel; needs batch/weight tiling "
        "with two-pass BN")  # TODO(synk): tiled two-pass BN scheme
    vmem_limit = int(min(max(2 * vb, 4 << 20), ceiling))

    kernel = functools.partial(
        _classification_head_kernel, batch=B, num_classes=num_classes)
    vmem_spec = pl.BlockSpec(memory_space=pltpu.MemorySpace.VMEM)

    out_p = pl.pallas_call(
        kernel,
        out_shape=jax.ShapeDtypeStruct((bp, ncp), jnp.float32),
        in_specs=[vmem_spec] * 5,
        out_specs=vmem_spec,
        compiler_params=pltpu.CompilerParams(vmem_limit_bytes=vmem_limit),
    )(xp, params["w1"], params["w2"], params["w3"], params["p"])

    return out_p[:B, :num_classes]


def init_params(key, in_channels, num_classes):
    """PyTorch-default-distribution params, pre-transposed to (fan_in, fan_out).

    Contraction/intermediate dims padded to the bf16 sublane tile (16); only
    the class (output-lane) dim is padded to 128 for lane-dense output stores.
    Weights stored as bf16; gamma/beta/b3 packed into a single (8, Pmax) f32
    operand. Linear biases for layers 1/2 are omitted (exactly cancelled by
    training-mode BatchNorm's mean subtraction).
    """
    c1, c2 = in_channels // 2, in_channels // 4
    cp = _round_up(in_channels, SUBLANE_BF16)
    c1p = _round_up(c1, SUBLANE_BF16)
    c2p = _round_up(c2, SUBLANE_BF16)
    ncp = _round_up(num_classes, LANE)
    ks = jax.random.split(key, 4)

    def linear_w(kw, fan_in, fan_out, fi_p, fo_p):
        # nn.Linear default weight init: U(-1/sqrt(fan_in), 1/sqrt(fan_in))
        bound = 1.0 / math.sqrt(fan_in)
        w = jax.random.uniform(kw, (fan_in, fan_out), jnp.float32, -bound, bound)
        w = jnp.pad(w, ((0, fi_p - fan_in), (0, fo_p - fan_out)))
        return w.astype(jnp.bfloat16)

    w1 = linear_w(ks[0], in_channels, c1, cp, c1p)
    w2 = linear_w(ks[1], c1, c2, c1p, c2p)
    w3 = linear_w(ks[2], c2, num_classes, c2p, ncp)
    bound3 = 1.0 / math.sqrt(c2)
    b3 = jax.random.uniform(ks[3], (num_classes,), jnp.float32, -bound3, bound3)

    pmax = max(c1p, c2p, ncp)
    p = jnp.zeros((8, pmax), jnp.float32)
    p = p.at[0, :c1].set(1.0)              # gamma1 (BN default), padded lanes 0
    # row 1: beta1 = 0
    p = p.at[2, :c2].set(1.0)              # gamma2
    # row 3: beta2 = 0
    p = p.at[4, :num_classes].set(b3)      # final Linear bias

    return {
        "w1": w1, "w2": w2, "w3": w3, "p": p,
        "in_channels": in_channels, "num_classes": num_classes,
    }


if __name__ == "__main__":
    in_channels = 32
    num_classes = 8
    batch = 8

    key = jax.random.PRNGKey(0)
    kx, kp = jax.random.split(key)
    x = jax.random.normal(kx, (batch, in_channels), jnp.float32)
    params = init_params(kp, in_channels, num_classes)

    out = jax.block_until_ready(classification_head(x, params))

    assert out.shape == (batch, num_classes)
    # exact-divide softmax -> rows sum to 1 at f32 precision
    assert jnp.allclose(jnp.sum(out, axis=1), 1.0, atol=1e-4)
    assert bool(jnp.all(out >= 0.0))
    print("KERNEL_OK")
</pallas_src>

<mosaic_0001>
module attributes {stable_mosaic.version = 11 : i64} {
  func.func @_classification_head_kernel(%arg0: memref<8x32xbf16, #tpu.memory_space<vmem>>, %arg1: memref<32x16xbf16, #tpu.memory_space<vmem>>, %arg2: memref<16x16xbf16, #tpu.memory_space<vmem>>, %arg3: memref<16x128xbf16, #tpu.memory_space<vmem>>, %arg4: memref<8x128xf32, #tpu.memory_space<vmem>>, %arg5: memref<8x128xf32, #tpu.memory_space<vmem>>) attributes {dimension_semantics = [], scalar_prefetch = 0 : i64, scratch_operands = 0 : i64, tpu.core_type = #tpu.core_type<tc>} {
    %c0 = arith.constant 0 : index
    %c0_0 = arith.constant 0 : index
    %0 = vector.load %arg0[%c0, %c0_0] : memref<8x32xbf16, #tpu.memory_space<vmem>>, vector<8x32xbf16>
    %c0_1 = arith.constant 0 : index
    %c0_2 = arith.constant 0 : index
    %1 = vector.load %arg1[%c0_1, %c0_2] : memref<32x16xbf16, #tpu.memory_space<vmem>>, vector<32x16xbf16>
    %cst = arith.constant dense<0.000000e+00> : vector<8x16xf32>
    %2 = tpu.matmul %0, %1, %cst {dimension_numbers = #tpu.dot_dimension_numbers<[1], [0], [0], [1], [0, 0, 1, 1], [], []>} : vector<8x32xbf16>, vector<32x16xbf16>, vector<8x16xf32> -> vector<8x16xf32>
    %c0_3 = arith.constant 0 : index
    %c0_4 = arith.constant 0 : index
    %3 = vector.load %arg4[%c0_3, %c0_4] : memref<8x128xf32, #tpu.memory_space<vmem>>, vector<1x16xf32>
    %c1 = arith.constant 1 : index
    %c0_5 = arith.constant 0 : index
    %4 = vector.load %arg4[%c1, %c0_5] : memref<8x128xf32, #tpu.memory_space<vmem>>, vector<1x16xf32>
    %cst_6 = arith.constant dense<0.000000e+00> : vector<16xf32>
    %5 = vector.multi_reduction <add>, %2, %cst_6 [0] : vector<8x16xf32> to vector<16xf32>
    %6 = vector.shape_cast %5 : vector<16xf32> to vector<1x16xf32>
    %cst_7 = arith.constant 1.250000e-01 : f32
    %7 = vector.broadcast %cst_7 : f32 to vector<1x16xf32>
    %8 = arith.mulf %6, %7 : vector<1x16xf32>
    %9 = vector.broadcast %8 : vector<1x16xf32> to vector<8x16xf32>
    %10 = arith.subf %2, %9 : vector<8x16xf32>
    %11 = arith.mulf %10, %10 : vector<8x16xf32>
    %cst_8 = arith.constant dense<0.000000e+00> : vector<16xf32>
    %12 = vector.multi_reduction <add>, %11, %cst_8 [0] : vector<8x16xf32> to vector<16xf32>
    %13 = vector.shape_cast %12 : vector<16xf32> to vector<1x16xf32>
    %cst_9 = arith.constant 1.250000e-01 : f32
    %14 = vector.broadcast %cst_9 : f32 to vector<1x16xf32>
    %15 = arith.mulf %13, %14 : vector<1x16xf32>
    %cst_10 = arith.constant 9.99999974E-6 : f32
    %16 = vector.broadcast %cst_10 : f32 to vector<1x16xf32>
    %17 = arith.addf %15, %16 : vector<1x16xf32>
    %18 = math.rsqrt %17 : vector<1x16xf32>
    %19 = arith.mulf %3, %18 : vector<1x16xf32>
    %20 = vector.broadcast %19 : vector<1x16xf32> to vector<8x16xf32>
    %21 = arith.mulf %10, %20 : vector<8x16xf32>
    %22 = vector.broadcast %4 : vector<1x16xf32> to vector<8x16xf32>
    %23 = arith.addf %21, %22 : vector<8x16xf32>
    %cst_11 = arith.constant 0.000000e+00 : f32
    %24 = vector.broadcast %cst_11 : f32 to vector<8x16xf32>
    %25 = arith.cmpf oge, %23, %24 : vector<8x16xf32>
    %cst_12 = arith.constant 1.000000e-03 : f32
    %26 = vector.broadcast %cst_12 : f32 to vector<8x16xf32>
    %27 = arith.mulf %26, %23 : vector<8x16xf32>
    %28 = arith.select %25, %23, %27 : vector<8x16xi1>, vector<8x16xf32>
    %29 = arith.truncf %28 : vector<8x16xf32> to vector<8x16xbf16>
    %c0_13 = arith.constant 0 : index
    %c0_14 = arith.constant 0 : index
    %30 = vector.load %arg2[%c0_13, %c0_14] : memref<16x16xbf16, #tpu.memory_space<vmem>>, vector<16x16xbf16>
    %cst_15 = arith.constant dense<0.000000e+00> : vector<8x16xf32>
    %31 = tpu.matmul %29, %30, %cst_15 {dimension_numbers = #tpu.dot_dimension_numbers<[1], [0], [0], [1], [0, 0, 1, 1], [], []>} : vector<8x16xbf16>, vector<16x16xbf16>, vector<8x16xf32> -> vector<8x16xf32>
    %c2 = arith.constant 2 : index
    %c0_16 = arith.constant 0 : index
    %32 = vector.load %arg4[%c2, %c0_16] : memref<8x128xf32, #tpu.memory_space<vmem>>, vector<1x16xf32>
    %c3 = arith.constant 3 : index
    %c0_17 = arith.constant 0 : index
    %33 = vector.load %arg4[%c3, %c0_17] : memref<8x128xf32, #tpu.memory_space<vmem>>, vector<1x16xf32>
    %cst_18 = arith.constant dense<0.000000e+00> : vector<16xf32>
    %34 = vector.multi_reduction <add>, %31, %cst_18 [0] : vector<8x16xf32> to vector<16xf32>
    %35 = vector.shape_cast %34 : vector<16xf32> to vector<1x16xf32>
    %cst_19 = arith.constant 1.250000e-01 : f32
    %36 = vector.broadcast %cst_19 : f32 to vector<1x16xf32>
    %37 = arith.mulf %35, %36 : vector<1x16xf32>
    %38 = vector.broadcast %37 : vector<1x16xf32> to vector<8x16xf32>
    %39 = arith.subf %31, %38 : vector<8x16xf32>
    %40 = arith.mulf %39, %39 : vector<8x16xf32>
    %cst_20 = arith.constant dense<0.000000e+00> : vector<16xf32>
    %41 = vector.multi_reduction <add>, %40, %cst_20 [0] : vector<8x16xf32> to vector<16xf32>
    %42 = vector.shape_cast %41 : vector<16xf32> to vector<1x16xf32>
    %cst_21 = arith.constant 1.250000e-01 : f32
    %43 = vector.broadcast %cst_21 : f32 to vector<1x16xf32>
    %44 = arith.mulf %42, %43 : vector<1x16xf32>
    %cst_22 = arith.constant 9.99999974E-6 : f32
    %45 = vector.broadcast %cst_22 : f32 to vector<1x16xf32>
    %46 = arith.addf %44, %45 : vector<1x16xf32>
    %47 = math.rsqrt %46 : vector<1x16xf32>
    %48 = arith.mulf %32, %47 : vector<1x16xf32>
    %49 = vector.broadcast %48 : vector<1x16xf32> to vector<8x16xf32>
    %50 = arith.mulf %39, %49 : vector<8x16xf32>
    %51 = vector.broadcast %33 : vector<1x16xf32> to vector<8x16xf32>
    %52 = arith.addf %50, %51 : vector<8x16xf32>
    %cst_23 = arith.constant 0.000000e+00 : f32
    %53 = vector.broadcast %cst_23 : f32 to vector<8x16xf32>
    %54 = arith.cmpf oge, %52, %53 : vector<8x16xf32>
    %cst_24 = arith.constant 1.000000e-03 : f32
    %55 = vector.broadcast %cst_24 : f32 to vector<8x16xf32>
    %56 = arith.mulf %55, %52 : vector<8x16xf32>
    %57 = arith.select %54, %52, %56 : vector<8x16xi1>, vector<8x16xf32>
    %58 = arith.truncf %57 : vector<8x16xf32> to vector<8x16xbf16>
    %c0_25 = arith.constant 0 : index
    %c0_26 = arith.constant 0 : index
    %59 = vector.load %arg3[%c0_25, %c0_26] : memref<16x128xbf16, #tpu.memory_space<vmem>>, vector<16x128xbf16>
    %cst_27 = arith.constant dense<0.000000e+00> : vector<8x128xf32>
    %60 = tpu.matmul %58, %59, %cst_27 {dimension_numbers = #tpu.dot_dimension_numbers<[1], [0], [0], [1], [0, 0, 1, 1], [], []>} : vector<8x16xbf16>, vector<16x128xbf16>, vector<8x128xf32> -> vector<8x128xf32>
    %c4 = arith.constant 4 : index
    %c0_28 = arith.constant 0 : index
    %61 = vector.load %arg4[%c4, %c0_28] : memref<8x128xf32, #tpu.memory_space<vmem>>, vector<1x128xf32>
    %62 = vector.broadcast %61 : vector<1x128xf32> to vector<8x128xf32>
    %63 = arith.addf %60, %62 : vector<8x128xf32>
    %64 = tpu.iota {dimensions = array<i32: 1>} : vector<1x128xi32>
    %c8_i32 = arith.constant 8 : i32
    %65 = vector.broadcast %c8_i32 : i32 to vector<1x128xi32>
    %66 = arith.cmpi slt, %64, %65 : vector<1x128xi32>
    %cst_29 = arith.constant -1.000000e+30 : f32
    %67 = vector.shape_cast %66 : vector<1x128xi1> to vector<1x128xi1>
    %68 = vector.broadcast %67 : vector<1x128xi1> to vector<8x128xi1>
    %69 = vector.broadcast %cst_29 : f32 to vector<8x128xf32>
    %70 = arith.select %68, %63, %69 : vector<8x128xi1>, vector<8x128xf32>
    %cst_30 = arith.constant dense<0xFF800000> : vector<8xf32>
    %71 = vector.multi_reduction <maximumf>, %70, %cst_30 [1] : vector<8x128xf32> to vector<8xf32>
    %72 = vector.shape_cast %71 : vector<8xf32> to vector<8x1xf32>
    %73 = vector.broadcast %72 : vector<8x1xf32> to vector<8x128xf32>
    %74 = arith.subf %70, %73 : vector<8x128xf32>
    %75 = math.exp %74 : vector<8x128xf32>
    %cst_31 = arith.constant dense<0.000000e+00> : vector<8xf32>
    %76 = vector.multi_reduction <add>, %75, %cst_31 [1] : vector<8x128xf32> to vector<8xf32>
    %77 = vector.shape_cast %76 : vector<8xf32> to vector<8x1xf32>
    %78 = vector.broadcast %77 : vector<8x1xf32> to vector<8x128xf32>
    %79 = arith.divf %75, %78 : vector<8x128xf32>
    %c0_32 = arith.constant 0 : index
    %c0_33 = arith.constant 0 : index
    %80 = vector.load %arg5[%c0_32, %c0_33] : memref<8x128xf32, #tpu.memory_space<vmem>>, vector<8x128xf32>
    tpu.vector_store %arg5[%c0_32, %c0_33], %79 {strides = array<i32>} : memref<8x128xf32, #tpu.memory_space<vmem>>, vector<8x128xf32>,
    return
  }
}

</mosaic_0001>

<llo_original>
// kernel: tpu_custom_call.1
$region0: #{tpu_custom_call.1}
  #allocation0 [shape = 'u32[]', space=smem, size = 0x4, offset = 0x4, fixed_abs, tag = 'smem constant byte address 0x4 - core index']
  #allocation1 [shape = 'u32[144,128]{1,0:T(1,128)}', space=vmem, size = 0x12000, scoped, tag = 'internal scratch']
  %s0 = inlined_call_operand.hbm [shape: bf16[8,32], index: 0, kind: input, shape index: {}]
  %s1 = inlined_call_operand.vmem [shape: bf16[32,16], index: 1, kind: input, shape index: {}]
  %s2 = inlined_call_operand.vmem [shape: bf16[16,16], index: 2, kind: input, shape index: {}]
  %s3 = inlined_call_operand.vmem [shape: bf16[16,128], index: 3, kind: input, shape index: {}]
  %s4 = inlined_call_operand.vmem [shape: f32[8,128], index: 4, kind: input, shape index: {}]
  %s5 = inlined_call_operand.hbm [shape: f32[8,128], index: 5, kind: output, shape index: {}]
  %s6 = sld [smem:[#allocation0]]
  $region34: #{tpu_custom_call.1} parent=0
    _
  %s8 = ssub.s32 1, %s6
  %s9 = scalar_select 0, %s8, %s6
  $region1: #{tpu_custom_call.1} parent=0
    #allocation2 [shape = 'u8[2048]{0}', space=vmem, size = 0x800, scoped, tag = 'input window, operand 0, single buffered']
    #allocation3 [shape = 's32[1]{0}', space=sflag, size = 0x4, scoped, tag = 'scoped memory for tpu_custom_call.1']
    #allocation4 [shape = 's32[1]{0}', space=sflag, size = 0x4, scoped, tag = 'scoped memory for tpu_custom_call.1']
    #allocation5 [shape = 'u8[4096]{0}', space=vmem, size = 0x1000, scoped, tag = 'output window, operand 0, single buffered']
    %10 = vsyncpa [#allocation3], 0
    %11 = vsyncpa [#allocation4], 0
    // Predicated region
    $region2: #{tpu_custom_call.1} parent=1 // pred_check
      _
    $region3: #{tpu_custom_call.1} parent=1 // pred_check_branch
      %13 = sbr.rel (0) target = $region5
    $region4: #{tpu_custom_call.1} parent=1 // pred_region
      %s15 = ssub.s32 64, 64
      %16 = vsyncadd [#allocation3], %s15
      %s18 = sshll.u32 [#allocation2], 4
      %s19 = int_to_ptr.vmem [resolvable:$true] %s18
      %21 = dma.hbm_to_vmem [thread:$0]  %s0, 64, %s19, [#allocation3]
    $region5: #{tpu_custom_call.1} parent=1 // pred_fallthru
      _
    // Predicated region
    $region6: #{tpu_custom_call.1} parent=1 // pred_check
      _
    $region7: #{tpu_custom_call.1} parent=1 // pred_check_branch
      %23 = sbr.rel (0) target = $region9
    $region8: #{tpu_custom_call.1} parent=1 // pred_region
      _
    $region9: #{tpu_custom_call.1} parent=1 // pred_fallthru
      _
    // Predicated region
    $region10: #{tpu_custom_call.1} parent=1 // pred_check
      _
    $region11: #{tpu_custom_call.1} parent=1 // pred_check_branch
      %25 = sbr.rel (0) target = $region13
    $region12: #{tpu_custom_call.1} parent=1 // pred_region
      _
    $region13: #{tpu_custom_call.1} parent=1 // pred_fallthru
      _
    // Predicated region
    $region14: #{tpu_custom_call.1} parent=1 // pred_check
      _
    $region15: #{tpu_custom_call.1} parent=1 // pred_check_branch
      %27 = sbr.rel (0) target = $region17
    $region16: #{tpu_custom_call.1} parent=1 // pred_region
      _
    $region17: #{tpu_custom_call.1} parent=1 // pred_fallthru
      _
    // Predicated region
    $region18: #{tpu_custom_call.1} parent=1 // pred_check
      _
    $region19: #{tpu_custom_call.1} parent=1 // pred_check_branch
      %29 = sbr.rel (0) target = $region21
    $region20: #{tpu_custom_call.1} parent=1 // pred_region
      _
    $region21: #{tpu_custom_call.1} parent=1 // pred_fallthru
      _
    // Predicated region
    $region22: #{tpu_custom_call.1} parent=1 // pred_check
      _
    $region23: #{tpu_custom_call.1} parent=1 // pred_check_branch
      %31 = sbr.rel (0) target = $region25
    $region24: #{tpu_custom_call.1} parent=1 // pred_region
      %32 = dma.done [#allocation3], 64
    $region25: #{tpu_custom_call.1} parent=1 // pred_fallthru
      _
    %v34 = vld [vmem:[#allocation2] sm:$0xf]
    %v35 = vld [vmem:[%s1] sm:$0xf]
    %v36 = vld [vmem:[%s1 + $0x4] sm:$0xf]
    %v37 = vld [vmem:[%s1 + $0x8] sm:$0xf]
    %v38 = vld [vmem:[%s1 + $0xc] sm:$0xf]
    %v43 = vunpack.c.l.b16 %v35
    %v44 = vunpack.c.l.b16 %v36
    %v45 = vunpack.c.l.b16 %v37
    %v46 = vunpack.c.l.b16 %v38
    %v47 = vpack.c.b16 %v44, %v43
    %v48 = vpack.c.b16 %v46, %v45
    %vm51 = vcmask 261120
    %v53 = vsel %vm51, %v34, 0
    %55 = vmatprep.subr.bf16.mxu0 0
    %56 = vmatpush1.bf16.msra.mxu0 %v47
    %57 = vmatprep.subr.bf16.mxu0 0
    %58 = vmatpush1.bf16.msra.mxu0 %v48
    %59 = vmatprep.subr.bf16.mxu0 0
    %60 = vmatpush1.bf16.msra.mxu0 0
    %61 = vmatprep.subr.bf16.mxu0 0
    %62 = vmatpush1.bf16.msra.mxu0 0
    %63 = vmatprep.subr.bf16.mxu0 0
    %64 = vmatpush1.bf16.msra.mxu0 0
    %65 = vmatprep.subr.bf16.mxu0 0
    %66 = vmatpush1.bf16.msra.mxu0 0
    %67 = vmatprep.subr.bf16.mxu0 0
    %68 = vmatpush1.bf16.msra.mxu0 0
    %69 = vmatprep.subr.bf16.mxu0 0
    %70 = vmatpush1.bf16.msra.mxu0 0
    %71 = vmatprep.subr.bf16.mxu0 0
    %72 = vmatpush1.bf16.msra.mxu0 0
    %73 = vmatprep.subr.bf16.mxu0 0
    %74 = vmatpush1.bf16.msra.mxu0 0
    %75 = vmatprep.subr.bf16.mxu0 0
    %76 = vmatpush1.bf16.msra.mxu0 0
    %77 = vmatprep.subr.bf16.mxu0 0
    %78 = vmatpush1.bf16.msra.mxu0 0
    %79 = vmatprep.subr.bf16.mxu0 0
    %80 = vmatpush1.bf16.msra.mxu0 0
    %81 = vmatprep.subr.bf16.mxu0 0
    %82 = vmatpush1.bf16.msra.mxu0 0
    %83 = vmatprep.subr.bf16.mxu0 0
    %84 = vmatpush1.bf16.msra.mxu0 0
    %85 = vmatprep.subr.bf16.mxu0 0
    %86 = vmatpush1.bf16.msra.mxu0 0
    %87 = vmatprep.mubr.bf16.mxu0 0
    %88 = vmatmul.mubr.bf16.gmra.mrb[0].mxu0 %v53
    %v89 = vpop.f32.mrb[0].mxu0
    %v90 = vadd.f32 0.0, %v89
    %v91 = vpop.f32.mrb[0].mxu0
    %v92 = vpop.f32.mrb[0].mxu0
    %v93 = vpop.f32.mrb[0].mxu0
    %94 = vdwg.mxu0
    %v95 = vld [vmem:[%s4] sm:$0x1]
    %v96 = vld [vmem:[%s4 + $0x1] sm:$0x1]
    %vm97 = vcmask 130048
    %v98 = vsel %vm97, %v90, 0.0
    %v99 = vrot.slane %v98, 4
    %v100 = vadd.f32 %v98, %v99
    %v101 = vrot.slane %v100, 2
    %v102 = vadd.f32 %v100, %v101
    %v103 = vrot.slane %v102, 1
    %v104 = vadd.f32 %v102, %v103
    %v105 = vmul.f32 %v104, 0.125
    %v106 = vsub.f32 %v90, %v105
    %v107 = vmul.f32 %v106, %v106
    %v108 = vsel %vm97, %v107, 0.0
    %v109 = vrot.slane %v108, 4
    %v110 = vadd.f32 %v108, %v109
    %v111 = vrot.slane %v110, 2
    %v112 = vadd.f32 %v110, %v111
    %v113 = vrot.slane %v112, 1
    %v114 = vadd.f32 %v112, %v113
    %v115 = vmul.f32 %v114, 0.125
    %v116 = vadd.f32 %v115, 1e-05
    %v117 = vrsqrt.pop %v116
    %v118 = vmul.f32 %v95, %v117
    %v119 = vlaneseq
    %v120 = vshrl.u32 %v119, 7
    %v121 = vsub.s32 0, %v120
    %v122 = vrot.slane %v118, %v121
    %v123 = vmul.f32 %v106, %v122
    %v124 = vlaneseq
    %v125 = vshrl.u32 %v124, 7
    %v126 = vsub.s32 0, %v125
    %v127 = vrot.slane %v96, %v126
    %v128 = vadd.f32 %v123, %v127
    %vm129 = vcmp.ge.f32.partialorder %v128, 0.0
    %v130 = vmul.f32 %v128, 0.001
    %v131 = vsel %vm129, %v128, %v130
    %v132 = vpack.c.bf16 %v131, %v131
    %v133 = vld [vmem:[%s2] sm:$0xf]
    %v134 = vld [vmem:[%s2 + $0x4] sm:$0xf]
    %v137 = vunpack.c.l.b16 %v133
    %v138 = vunpack.c.l.b16 %v134
    %v139 = vpack.c.b16 %v138, %v137
    %v142 = vsel %vm97, %v132, 0
    %144 = vmatprep.subr.bf16.mxu0 0
    %145 = vmatpush1.bf16.msra.mxu0 %v139
    %146 = vmatprep.subr.bf16.mxu0 0
    %147 = vmatpush1.bf16.msra.mxu0 0
    %148 = vmatprep.subr.bf16.mxu0 0
    %149 = vmatpush1.bf16.msra.mxu0 0
    %150 = vmatprep.subr.bf16.mxu0 0
    %151 = vmatpush1.bf16.msra.mxu0 0
    %152 = vmatprep.subr.bf16.mxu0 0
    %153 = vmatpush1.bf16.msra.mxu0 0
    %154 = vmatprep.subr.bf16.mxu0 0
    %155 = vmatpush1.bf16.msra.mxu0 0
    %156 = vmatprep.subr.bf16.mxu0 0
    %157 = vmatpush1.bf16.msra.mxu0 0
    %158 = vmatprep.subr.bf16.mxu0 0
    %159 = vmatpush1.bf16.msra.mxu0 0
    %160 = vmatprep.subr.bf16.mxu0 0
    %161 = vmatpush1.bf16.msra.mxu0 0
    %162 = vmatprep.subr.bf16.mxu0 0
    %163 = vmatpush1.bf16.msra.mxu0 0
    %164 = vmatprep.subr.bf16.mxu0 0
    %165 = vmatpush1.bf16.msra.mxu0 0
    %166 = vmatprep.subr.bf16.mxu0 0
    %167 = vmatpush1.bf16.msra.mxu0 0
    %168 = vmatprep.subr.bf16.mxu0 0
    %169 = vmatpush1.bf16.msra.mxu0 0
    %170 = vmatprep.subr.bf16.mxu0 0
    %171 = vmatpush1.bf16.msra.mxu0 0
    %172 = vmatprep.subr.bf16.mxu0 0
    %173 = vmatpush1.bf16.msra.mxu0 0
    %174 = vmatprep.subr.bf16.mxu0 0
    %175 = vmatpush1.bf16.msra.mxu0 0
    %176 = vmatprep.mubr.bf16.mxu0 0
    %177 = vmatmul.mubr.bf16.gmra.mrb[0].mxu0 %v142
    %v178 = vpop.f32.mrb[0].mxu0
    %v179 = vadd.f32 0.0, %v178
    %v180 = vpop.f32.mrb[0].mxu0
    %v181 = vpop.f32.mrb[0].mxu0
    %v182 = vpop.f32.mrb[0].mxu0
    %183 = vdwg.mxu0
    %v184 = vld [vmem:[%s4 + $0x2] sm:$0x1]
    %v185 = vld [vmem:[%s4 + $0x3] sm:$0x1]
    %v186 = vsel %vm97, %v179, 0.0
    %v187 = vrot.slane %v186, 4
    %v188 = vadd.f32 %v186, %v187
    %v189 = vrot.slane %v188, 2
    %v190 = vadd.f32 %v188, %v189
    %v191 = vrot.slane %v190, 1
    %v192 = vadd.f32 %v190, %v191
    %v193 = vmul.f32 %v192, 0.125
    %v194 = vsub.f32 %v179, %v193
    %v195 = vmul.f32 %v194, %v194
    %v196 = vsel %vm97, %v195, 0.0
    %v197 = vrot.slane %v196, 4
    %v198 = vadd.f32 %v196, %v197
    %v199 = vrot.slane %v198, 2
    %v200 = vadd.f32 %v198, %v199
    %v201 = vrot.slane %v200, 1
    %v202 = vadd.f32 %v200, %v201
    %v203 = vmul.f32 %v202, 0.125
    %v204 = vadd.f32 %v203, 1e-05
    %v205 = vrsqrt.pop %v204
    %v206 = vmul.f32 %v184, %v205
    %v207 = vlaneseq
    %v208 = vshrl.u32 %v207, 7
    %v209 = vsub.s32 0, %v208
    %v210 = vrot.slane %v206, %v209
    %v211 = vmul.f32 %v194, %v210
    %v212 = vlaneseq
    %v213 = vshrl.u32 %v212, 7
    %v214 = vsub.s32 0, %v213
    %v215 = vrot.slane %v185, %v214
    %v216 = vadd.f32 %v211, %v215
    %vm217 = vcmp.ge.f32.partialorder %v216, 0.0
    %v218 = vmul.f32 %v216, 0.001
    %v219 = vsel %vm217, %v216, %v218
    %v220 = vpack.c.bf16 %v219, %v219
    %v221 = vld [vmem:[%s3] sm:$0xf]
    %v222 = vld [vmem:[%s3 + $0x4] sm:$0xf]
    %v223 = vld [vmem:[%s4 + $0x4] sm:$0x1]
    %v224 = vlaneseq
    %v225 = vshrl.u32 %v224, 7
    %v226 = vsub.s32 0, %v225
    %v227 = vrot.slane %v223, %v226
    %v230 = vunpack.c.l.b16 %v221
    %v231 = vunpack.c.l.b16 %v222
    %v232 = vpack.c.b16 %v231, %v230
    %v235 = vsel %vm97, %v220, 0
    %237 = vmatprep.subr.bf16.mxu0 0
    %238 = vmatpush1.bf16.msra.mxu0 %v232
    %239 = vmatprep.subr.bf16.mxu0 0
    %240 = vmatpush1.bf16.msra.mxu0 0
    %241 = vmatprep.subr.bf16.mxu0 0
    %242 = vmatpush1.bf16.msra.mxu0 0
    %243 = vmatprep.subr.bf16.mxu0 0
    %244 = vmatpush1.bf16.msra.mxu0 0
    %245 = vmatprep.subr.bf16.mxu0 0
    %246 = vmatpush1.bf16.msra.mxu0 0
    %247 = vmatprep.subr.bf16.mxu0 0
    %248 = vmatpush1.bf16.msra.mxu0 0
    %249 = vmatprep.subr.bf16.mxu0 0
    %250 = vmatpush1.bf16.msra.mxu0 0
    %251 = vmatprep.subr.bf16.mxu0 0
    %252 = vmatpush1.bf16.msra.mxu0 0
    %253 = vmatprep.subr.bf16.mxu0 0
    %254 = vmatpush1.bf16.msra.mxu0 0
    %255 = vmatprep.subr.bf16.mxu0 0
    %256 = vmatpush1.bf16.msra.mxu0 0
    %257 = vmatprep.subr.bf16.mxu0 0
    %258 = vmatpush1.bf16.msra.mxu0 0
    %259 = vmatprep.subr.bf16.mxu0 0
    %260 = vmatpush1.bf16.msra.mxu0 0
    %261 = vmatprep.subr.bf16.mxu0 0
    %262 = vmatpush1.bf16.msra.mxu0 0
    %263 = vmatprep.subr.bf16.mxu0 0
    %264 = vmatpush1.bf16.msra.mxu0 0
    %265 = vmatprep.subr.bf16.mxu0 0
    %266 = vmatpush1.bf16.msra.mxu0 0
    %267 = vmatprep.subr.bf16.mxu0 0
    %268 = vmatpush1.bf16.msra.mxu0 0
    %269 = vmatprep.mubr.bf16.mxu0 0
    %270 = vmatmul.mubr.bf16.gmra.mrb[0].mxu0 %v235
    %v271 = vpop.f32.mrb[0].mxu0
    %v272 = vadd.f32 %v227, %v271
    %v273 = vpop.f32.mrb[0].mxu0
    %v274 = vpop.f32.mrb[0].mxu0
    %v275 = vpop.f32.mrb[0].mxu0
    %276 = vdwg.mxu0
    %v277 = vlaneseq
    %v278 = vand.u32 %v277, 127
    %vm279 = vcmp.lt.s32.totalorder %v278, 8
    %v280 = vsel %vm279, 1, 0
    %vm281 = vcmp.eq.s32.totalorder %v280, 1
    %v282 = vsel %vm281, %v272, -1e+30
    %283 = vmax.xlane.f32.xlu0 %v282
    %v284 = vpop.xlane.xlu0 %283
    %v285 = vsub.f32 %v282, %v284
    %v286 = vmul.f32 %v285, 1.442695
    %v287 = vpow.pop %v286
    %288 = vadd.xlane.f32.xlu0 %v287
    %v289 = vpop.xlane.xlu0 %288
    %v290 = vrcp.pop %v289
    %v291 = vmul.f32 %v287, %v290
    %292 = vst [vmem:[#allocation5] sm:$0xff] %v291
    // Predicated region
    $region26: #{tpu_custom_call.1} parent=1 // pred_check
      _
    $region27: #{tpu_custom_call.1} parent=1 // pred_check_branch
      %294 = sbr.rel (0) target = $region29
    $region28: #{tpu_custom_call.1} parent=1 // pred_region
      %s296 = ssub.s32 128, 128
      %297 = vsyncadd [#allocation4], %s296
      %s299 = sshll.u32 [#allocation5], 4
      %s300 = int_to_ptr.vmem [resolvable:$true] %s299
      %302 = dma.vmem_to_hbm [thread:$0]  %s300, 128, %s5, [#allocation4]
    $region29: #{tpu_custom_call.1} parent=1 // pred_fallthru
      _
    // Predicated region
    $region30: #{tpu_custom_call.1} parent=1 // pred_check
      _
    $region31: #{tpu_custom_call.1} parent=1 // pred_check_branch
      %304 = sbr.rel (0) target = $region33
    $region32: #{tpu_custom_call.1} parent=1 // pred_region
      %305 = dma.done [#allocation4], 128
    $region33: #{tpu_custom_call.1} parent=1 // pred_fallthru
      _
    %306 = vsyncpa [#allocation3], 1
    %307 = vsyncpa [#allocation4], 1

</llo_original>
